<compile_context>
chip_gen: v7x
topology: tpu7x:2x2x1
jax: 0.10.0
libtpu: 0.0.40
codegen_flags: <defaults>
</compile_context>

<pallas_src>
import math
import jax
import jax.numpy as jnp
from jax.experimental import pallas as pl
from jax.experimental.pallas import tpu as pltpu

# ---------------- problem sizes (small, consistent with the module) ----------
BATCH = 2
SEQ = 8          # L
MODEL_DIM = 8    # D
HEADS = 2        # H
DH = MODEL_DIM // HEADS          # 4
DD = MODEL_DIM * DH              # channels fed to the diagonal block = H*dh*dh
HID_DIM = 16
DT_MIN, DT_MAX = 1e-3, 1e-1


# ---------------------------- Pallas kernel ----------------------------------
def h3_kernel(x_ref, wqkv_ref, wo_ref, rrep_ref, stile_ref, gsum_ref,
              kshift_ref, dshift_ref, kdiag_ref, ddiag_ref, o_ref):
    x = x_ref[...]                                      # (B*L, D), bf16

    # Fused QKV projection: one bf16 MXU matmul, f32 accumulation.
    qkv = jnp.dot(x, wqkv_ref[...], preferred_element_type=jnp.float32)
    q = qkv[:, :MODEL_DIM]
    k = qkv[:, MODEL_DIM:2 * MODEL_DIM]
    v = qkv[:, 2 * MODEL_DIM:]

    def causal_conv(u, kern, skip):
        # u: (B*L, C) with batch folded into rows; kern: (L, C); skip: (1, C)
        # y[b*L+t, c] = sum_{l<=t} kern[l, c] * u[b*L+t-l, c] + skip[c]*u[b*L+t, c]
        t_loc = jax.lax.broadcasted_iota(jnp.int32, u.shape, 0) % SEQ
        acc = kern[0:1, :] * u                          # lag 0
        for l in range(1, SEQ):
            rolled = pltpu.roll(u, l, 0)                # rolled[r] = u[(r-l) % B*L]
            rolled = jnp.where(t_loc >= l, rolled, 0.0)  # mask on LOCAL seq index
            acc = acc + kern[l:l + 1, :] * rolled
        return acc + skip * u

    # Shift-SSM applied to K (taps/skip loaded once, re-indexed per lag).
    k = causal_conv(k, kshift_ref[...], dshift_ref[...])

    # KV[:, h*dh*dh + c*dh + d] = K[:, h*dh + c] * V[:, h*dh + d]
    # via constant replicate / tile matrices on the (otherwise idle) MXU.
    rrep = rrep_ref[...]
    kv = (jnp.dot(k, rrep, preferred_element_type=jnp.float32)
          * jnp.dot(v, stile_ref[...], preferred_element_type=jnp.float32))

    # Diagonal S4D block across the H*dh*dh channels.
    kv = causal_conv(kv, kdiag_ref[...], ddiag_ref[...])

    # O[:, h*dh + d] = sum_c Q[:, h*dh + c] * KV[:, h*dh*dh + c*dh + d]
    qrep = jnp.dot(q, rrep, preferred_element_type=jnp.float32)
    o = jnp.dot(qrep * kv, gsum_ref[...], preferred_element_type=jnp.float32)

    # Output projection (bf16 MXU inputs, f32 accumulation / f32 store).
    o_ref[...] = jnp.dot(o.astype(jnp.bfloat16), wo_ref[...],
                         preferred_element_type=jnp.float32)


def _full_spec(a):
    # Whole-array block (no grid): last two dims equal full array dims.
    return pl.BlockSpec(a.shape, lambda: tuple(0 for _ in a.shape))


def h3_block_forward(x, wq, wk, wv, wo, kshift, dshift, kdiag, ddiag):
    B, L, D = x.shape
    BL = B * L

    # Fold batch into rows; bf16 inputs for the MXU matmuls (f32 accumulate).
    x2 = x.reshape(BL, D).astype(jnp.bfloat16)
    wqkv = jnp.concatenate([wq, wk, wv], axis=1).astype(jnp.bfloat16)   # (D, 3D)
    wo_b = wo.astype(jnp.bfloat16)

    # Constant 0/1 matrices replacing the per-head Python loops:
    #   rrep  (D, DD): column j = h*dh*dh + c*dh + d picks K/Q channel h*dh + c
    #   stile (D, DD): column j picks V channel h*dh + d
    #   gsum  (DD, D): sums each dh-lane group back to output channel h*dh + d
    j = jnp.arange(DD)
    h = j // (DH * DH)
    c = (j // DH) % DH
    d = j % DH
    rows = jnp.arange(D)[:, None]
    rrep = (rows == (h * DH + c)[None, :]).astype(jnp.float32)
    stile = (rows == (h * DH + d)[None, :]).astype(jnp.float32)
    gsum = stile.T

    args = (x2, wqkv, wo_b, rrep, stile, gsum, kshift, dshift, kdiag, ddiag)
    out = pl.pallas_call(
        h3_kernel,
        out_shape=jax.ShapeDtypeStruct((BL, D), jnp.float32),
        in_specs=[_full_spec(a) for a in args],
        out_specs=pl.BlockSpec((BL, D), lambda: (0, 0)),
    )(*args)
    return out.reshape(B, L, D)


# ----------------------- parameter setup (plain-JAX glue) --------------------
def make_shift_params(key, channels, hid_dim, L):
    k1, k2 = jax.random.split(key)
    C = jax.random.normal(k1, (channels, hid_dim), jnp.float32) / math.sqrt(hid_dim)
    Dskip = jax.random.normal(k2, (channels,), jnp.float32)
    lk = min(L, hid_dim)
    K = jnp.zeros((L, channels), jnp.float32).at[:lk, :].set(C[:, :lk].T)
    return K, Dskip.reshape(1, channels)


def make_s4d_params(key, channels, hid_dim, L, dt_min, dt_max):
    N = hid_dim // 2
    k1, k2, k3, k4 = jax.random.split(key, 4)
    # S4D-Inv initialization of the diagonal A
    n = jnp.arange(N, dtype=jnp.float32)
    A_re = -0.5 * jnp.ones((channels, N), jnp.float32)
    A_im = (hid_dim / jnp.pi) * (hid_dim / (2.0 * n + 1.0) - 1.0)
    A = A_re + 1j * jnp.broadcast_to(A_im, (channels, N))
    # log-uniform time steps
    log_dt = (jax.random.uniform(k1, (channels,), jnp.float32)
              * (math.log(dt_max) - math.log(dt_min)) + math.log(dt_min))
    dt = jnp.exp(log_dt)[:, None]
    B = jnp.ones((channels, N), jnp.complex64)
    C = (jax.random.normal(k2, (channels, N), jnp.float32)
         + 1j * jax.random.normal(k3, (channels, N), jnp.float32)) * (0.5 ** 0.5)
    # bilinear discretization
    dA = (1.0 + dt * A / 2.0) / (1.0 - dt * A / 2.0)
    dB = dt * B / (1.0 - dt * A / 2.0)
    ell = jnp.arange(L)
    vand = dA[:, :, None] ** ell[None, None, :]                 # (channels, N, L)
    K = 2.0 * jnp.real(jnp.einsum('cn,cn,cnl->cl', C, dB, vand))  # (channels, L)
    Dskip = jax.random.normal(k4, (channels,), jnp.float32)
    return K.T.astype(jnp.float32), Dskip.reshape(1, channels)


# -------------------------- pure-JAX reference -------------------------------
def reference(x, wq, wk, wv, wo, kshift, dshift, kdiag, ddiag):
    B, L, D = x.shape

    def conv(u, kern, skip):
        out = jnp.zeros_like(u)
        for l in range(L):
            out = out.at[:, l:, :].add(kern[l][None, None, :] * u[:, :L - l, :])
        return out + skip[0][None, None, :] * u

    Q = x @ wq
    K = conv(x @ wk, kshift, dshift)
    V = x @ wv
    Qh = Q.reshape(B, L, HEADS, DH).transpose(0, 2, 1, 3)
    Kh = K.reshape(B, L, HEADS, DH).transpose(0, 2, 1, 3)
    Vh = V.reshape(B, L, HEADS, DH).transpose(0, 2, 1, 3)
    KV = Kh[..., :, None] * Vh[..., None, :]                    # (B,H,L,dh,dh)
    KV = KV.transpose(0, 2, 1, 3, 4).reshape(B, L, -1)
    KV = conv(KV, kdiag, ddiag)
    KV = KV.reshape(B, L, HEADS, DH, DH).transpose(0, 2, 1, 3, 4)
    O = jnp.einsum('bhnc,bhncd->bhnd', Qh, KV)
    O = O.transpose(0, 2, 1, 3).reshape(B, L, -1)
    return O @ wo


# ------------------------------------ main ------------------------------------
if __name__ == "__main__":
    key = jax.random.PRNGKey(0)
    kx, kq, kk, kvw, ko, ks, kd = jax.random.split(key, 7)

    x = jax.random.normal(kx, (BATCH, SEQ, MODEL_DIM), jnp.float32)

    bound = 1.0 / math.sqrt(MODEL_DIM)
    # weights stored already transposed so the kernel computes x @ W  (== torch x @ W.T)
    wq = jax.random.uniform(kq, (MODEL_DIM, MODEL_DIM), jnp.float32, -bound, bound)
    wk = jax.random.uniform(kk, (MODEL_DIM, MODEL_DIM), jnp.float32, -bound, bound)
    wv = jax.random.uniform(kvw, (MODEL_DIM, MODEL_DIM), jnp.float32, -bound, bound)
    wo = jax.random.uniform(ko, (MODEL_DIM, MODEL_DIM), jnp.float32, -bound, bound)

    kshift, dshift = make_shift_params(ks, MODEL_DIM, HID_DIM, SEQ)
    kdiag, ddiag = make_s4d_params(kd, DD, HID_DIM, SEQ, DT_MIN, DT_MAX)

    out = h3_block_forward(x, wq, wk, wv, wo, kshift, dshift, kdiag, ddiag)
    out = jax.block_until_ready(out)

    ref = reference(x, wq, wk, wv, wo, kshift, dshift, kdiag, ddiag)
    assert out.shape == (BATCH, SEQ, MODEL_DIM)
    err = jnp.max(jnp.abs(out - ref))
    assert jnp.allclose(out, ref, atol=2e-2, rtol=2e-2), f"mismatch: max abs err {err}"

    print("KERNEL_OK")
</pallas_src>

<mosaic_0001>
module attributes {stable_mosaic.version = 11 : i64} {
  func.func @h3_kernel(%arg0: memref<16x8xbf16, #tpu.memory_space<vmem>>, %arg1: memref<8x24xbf16, #tpu.memory_space<vmem>>, %arg2: memref<8x8xbf16, #tpu.memory_space<vmem>>, %arg3: memref<8x32xf32, #tpu.memory_space<vmem>>, %arg4: memref<8x32xf32, #tpu.memory_space<vmem>>, %arg5: memref<32x8xf32, #tpu.memory_space<vmem>>, %arg6: memref<8x8xf32, #tpu.memory_space<vmem>>, %arg7: memref<1x8xf32, #tpu.memory_space<vmem>>, %arg8: memref<8x32xf32, #tpu.memory_space<vmem>>, %arg9: memref<1x32xf32, #tpu.memory_space<vmem>>, %arg10: memref<16x8xf32, #tpu.memory_space<vmem>>) attributes {dimension_semantics = [], scalar_prefetch = 0 : i64, scratch_operands = 0 : i64, tpu.core_type = #tpu.core_type<tc>} {
    %c0 = arith.constant 0 : index
    %c0_0 = arith.constant 0 : index
    %0 = vector.load %arg0[%c0, %c0_0] : memref<16x8xbf16, #tpu.memory_space<vmem>>, vector<16x8xbf16>
    %c0_1 = arith.constant 0 : index
    %c0_2 = arith.constant 0 : index
    %1 = vector.load %arg1[%c0_1, %c0_2] : memref<8x24xbf16, #tpu.memory_space<vmem>>, vector<8x24xbf16>
    %cst = arith.constant dense<0.000000e+00> : vector<16x24xf32>
    %2 = tpu.matmul %0, %1, %cst {dimension_numbers = #tpu.dot_dimension_numbers<[1], [0], [0], [1], [0, 0, 1, 1], [], []>} : vector<16x8xbf16>, vector<8x24xbf16>, vector<16x24xf32> -> vector<16x24xf32>
    %3 = vector.extract_strided_slice %2 {offsets = [0, 0], sizes = [16, 8], strides = [1, 1]} : vector<16x24xf32> to vector<16x8xf32>
    %4 = vector.extract_strided_slice %2 {offsets = [0, 8], sizes = [16, 8], strides = [1, 1]} : vector<16x24xf32> to vector<16x8xf32>
    %5 = vector.extract_strided_slice %2 {offsets = [0, 16], sizes = [16, 8], strides = [1, 1]} : vector<16x24xf32> to vector<16x8xf32>
    %c0_3 = arith.constant 0 : index
    %c0_4 = arith.constant 0 : index
    %6 = vector.load %arg6[%c0_3, %c0_4] : memref<8x8xf32, #tpu.memory_space<vmem>>, vector<8x8xf32>
    %c0_5 = arith.constant 0 : index
    %c0_6 = arith.constant 0 : index
    %7 = vector.load %arg7[%c0_5, %c0_6] : memref<1x8xf32, #tpu.memory_space<vmem>>, vector<1x8xf32>
    %8 = tpu.iota {dimensions = array<i32: 0>} : vector<16x8xi32>
    %c8_i32 = arith.constant 8 : i32
    %c0_i32 = arith.constant 0 : i32
    %9 = arith.cmpi eq, %c8_i32, %c0_i32 : i32
    %c1_i32 = arith.constant 1 : i32
    %10 = arith.select %9, %c1_i32, %c8_i32 : i32
    %11 = vector.broadcast %10 : i32 to vector<16x8xi32>
    %12 = arith.remsi %8, %11 : vector<16x8xi32>
    %c0_i32_7 = arith.constant 0 : i32
    %13 = vector.broadcast %c0_i32_7 : i32 to vector<16x8xi32>
    %14 = arith.cmpi ne, %12, %13 : vector<16x8xi32>
    %c0_i32_8 = arith.constant 0 : i32
    %15 = vector.broadcast %c0_i32_8 : i32 to vector<16x8xi32>
    %16 = arith.cmpi slt, %12, %15 : vector<16x8xi32>
    %c0_i32_9 = arith.constant 0 : i32
    %17 = arith.cmpi slt, %10, %c0_i32_9 : i32
    %18 = vector.broadcast %17 : i1 to vector<16x8xi1>
    %19 = vector.broadcast %18 : vector<16x8xi1> to vector<16x8xi1>
    %20 = arith.xori %16, %19 : vector<16x8xi1>
    %21 = arith.andi %20, %14 : vector<16x8xi1>
    %22 = vector.broadcast %10 : i32 to vector<16x8xi32>
    %23 = arith.addi %12, %22 : vector<16x8xi32>
    %24 = arith.select %21, %23, %12 : vector<16x8xi1>, vector<16x8xi32>
    %25 = vector.extract_strided_slice %6 {offsets = [0, 0], sizes = [1, 8], strides = [1, 1]} : vector<8x8xf32> to vector<1x8xf32>
    %26 = vector.broadcast %25 : vector<1x8xf32> to vector<16x8xf32>
    %27 = arith.mulf %26, %4 : vector<16x8xf32>
    %c1_i32_10 = arith.constant 1 : i32
    %28 = tpu.dynamic_rotate %4 by %c1_i32_10 dim 0 : vector<16x8xf32>, i32 -> vector<16x8xf32>
    %c1_i32_11 = arith.constant 1 : i32
    %29 = vector.broadcast %c1_i32_11 : i32 to vector<16x8xi32>
    %30 = arith.cmpi sge, %24, %29 : vector<16x8xi32>
    %cst_12 = arith.constant 0.000000e+00 : f32
    %31 = vector.broadcast %cst_12 : f32 to vector<16x8xf32>
    %32 = arith.select %30, %28, %31 : vector<16x8xi1>, vector<16x8xf32>
    %33 = vector.extract_strided_slice %6 {offsets = [1, 0], sizes = [1, 8], strides = [1, 1]} : vector<8x8xf32> to vector<1x8xf32>
    %34 = vector.broadcast %33 : vector<1x8xf32> to vector<16x8xf32>
    %35 = arith.mulf %34, %32 : vector<16x8xf32>
    %36 = arith.addf %27, %35 : vector<16x8xf32>
    %c2_i32 = arith.constant 2 : i32
    %37 = tpu.dynamic_rotate %4 by %c2_i32 dim 0 : vector<16x8xf32>, i32 -> vector<16x8xf32>
    %c2_i32_13 = arith.constant 2 : i32
    %38 = vector.broadcast %c2_i32_13 : i32 to vector<16x8xi32>
    %39 = arith.cmpi sge, %24, %38 : vector<16x8xi32>
    %cst_14 = arith.constant 0.000000e+00 : f32
    %40 = vector.broadcast %cst_14 : f32 to vector<16x8xf32>
    %41 = arith.select %39, %37, %40 : vector<16x8xi1>, vector<16x8xf32>
    %42 = vector.extract_strided_slice %6 {offsets = [2, 0], sizes = [1, 8], strides = [1, 1]} : vector<8x8xf32> to vector<1x8xf32>
    %43 = vector.broadcast %42 : vector<1x8xf32> to vector<16x8xf32>
    %44 = arith.mulf %43, %41 : vector<16x8xf32>
    %45 = arith.addf %36, %44 : vector<16x8xf32>
    %c3_i32 = arith.constant 3 : i32
    %46 = tpu.dynamic_rotate %4 by %c3_i32 dim 0 : vector<16x8xf32>, i32 -> vector<16x8xf32>
    %c3_i32_15 = arith.constant 3 : i32
    %47 = vector.broadcast %c3_i32_15 : i32 to vector<16x8xi32>
    %48 = arith.cmpi sge, %24, %47 : vector<16x8xi32>
    %cst_16 = arith.constant 0.000000e+00 : f32
    %49 = vector.broadcast %cst_16 : f32 to vector<16x8xf32>
    %50 = arith.select %48, %46, %49 : vector<16x8xi1>, vector<16x8xf32>
    %51 = vector.extract_strided_slice %6 {offsets = [3, 0], sizes = [1, 8], strides = [1, 1]} : vector<8x8xf32> to vector<1x8xf32>
    %52 = vector.broadcast %51 : vector<1x8xf32> to vector<16x8xf32>
    %53 = arith.mulf %52, %50 : vector<16x8xf32>
    %54 = arith.addf %45, %53 : vector<16x8xf32>
    %c4_i32 = arith.constant 4 : i32
    %55 = tpu.dynamic_rotate %4 by %c4_i32 dim 0 : vector<16x8xf32>, i32 -> vector<16x8xf32>
    %c4_i32_17 = arith.constant 4 : i32
    %56 = vector.broadcast %c4_i32_17 : i32 to vector<16x8xi32>
    %57 = arith.cmpi sge, %24, %56 : vector<16x8xi32>
    %cst_18 = arith.constant 0.000000e+00 : f32
    %58 = vector.broadcast %cst_18 : f32 to vector<16x8xf32>
    %59 = arith.select %57, %55, %58 : vector<16x8xi1>, vector<16x8xf32>
    %60 = vector.extract_strided_slice %6 {offsets = [4, 0], sizes = [1, 8], strides = [1, 1]} : vector<8x8xf32> to vector<1x8xf32>
    %61 = vector.broadcast %60 : vector<1x8xf32> to vector<16x8xf32>
    %62 = arith.mulf %61, %59 : vector<16x8xf32>
    %63 = arith.addf %54, %62 : vector<16x8xf32>
    %c5_i32 = arith.constant 5 : i32
    %64 = tpu.dynamic_rotate %4 by %c5_i32 dim 0 : vector<16x8xf32>, i32 -> vector<16x8xf32>
    %c5_i32_19 = arith.constant 5 : i32
    %65 = vector.broadcast %c5_i32_19 : i32 to vector<16x8xi32>
    %66 = arith.cmpi sge, %24, %65 : vector<16x8xi32>
    %cst_20 = arith.constant 0.000000e+00 : f32
    %67 = vector.broadcast %cst_20 : f32 to vector<16x8xf32>
    %68 = arith.select %66, %64, %67 : vector<16x8xi1>, vector<16x8xf32>
    %69 = vector.extract_strided_slice %6 {offsets = [5, 0], sizes = [1, 8], strides = [1, 1]} : vector<8x8xf32> to vector<1x8xf32>
    %70 = vector.broadcast %69 : vector<1x8xf32> to vector<16x8xf32>
    %71 = arith.mulf %70, %68 : vector<16x8xf32>
    %72 = arith.addf %63, %71 : vector<16x8xf32>
    %c6_i32 = arith.constant 6 : i32
    %73 = tpu.dynamic_rotate %4 by %c6_i32 dim 0 : vector<16x8xf32>, i32 -> vector<16x8xf32>
    %c6_i32_21 = arith.constant 6 : i32
    %74 = vector.broadcast %c6_i32_21 : i32 to vector<16x8xi32>
    %75 = arith.cmpi sge, %24, %74 : vector<16x8xi32>
    %cst_22 = arith.constant 0.000000e+00 : f32
    %76 = vector.broadcast %cst_22 : f32 to vector<16x8xf32>
    %77 = arith.select %75, %73, %76 : vector<16x8xi1>, vector<16x8xf32>
    %78 = vector.extract_strided_slice %6 {offsets = [6, 0], sizes = [1, 8], strides = [1, 1]} : vector<8x8xf32> to vector<1x8xf32>
    %79 = vector.broadcast %78 : vector<1x8xf32> to vector<16x8xf32>
    %80 = arith.mulf %79, %77 : vector<16x8xf32>
    %81 = arith.addf %72, %80 : vector<16x8xf32>
    %c7_i32 = arith.constant 7 : i32
    %82 = tpu.dynamic_rotate %4 by %c7_i32 dim 0 : vector<16x8xf32>, i32 -> vector<16x8xf32>
    %c7_i32_23 = arith.constant 7 : i32
    %83 = vector.broadcast %c7_i32_23 : i32 to vector<16x8xi32>
    %84 = arith.cmpi sge, %24, %83 : vector<16x8xi32>
    %cst_24 = arith.constant 0.000000e+00 : f32
    %85 = vector.broadcast %cst_24 : f32 to vector<16x8xf32>
    %86 = arith.select %84, %82, %85 : vector<16x8xi1>, vector<16x8xf32>
    %87 = vector.extract_strided_slice %6 {offsets = [7, 0], sizes = [1, 8], strides = [1, 1]} : vector<8x8xf32> to vector<1x8xf32>
    %88 = vector.broadcast %87 : vector<1x8xf32> to vector<16x8xf32>
    %89 = arith.mulf %88, %86 : vector<16x8xf32>
    %90 = arith.addf %81, %89 : vector<16x8xf32>
    %91 = vector.broadcast %7 : vector<1x8xf32> to vector<16x8xf32>
    %92 = arith.mulf %91, %4 : vector<16x8xf32>
    %93 = arith.addf %90, %92 : vector<16x8xf32>
    %c0_25 = arith.constant 0 : index
    %c0_26 = arith.constant 0 : index
    %94 = vector.load %arg3[%c0_25, %c0_26] : memref<8x32xf32, #tpu.memory_space<vmem>>, vector<8x32xf32>
    %cst_27 = arith.constant dense<0.000000e+00> : vector<16x32xf32>
    %95 = tpu.matmul %93, %94, %cst_27 {dimension_numbers = #tpu.dot_dimension_numbers<[1], [0], [0], [1], [0, 0, 1, 1], [], []>} : vector<16x8xf32>, vector<8x32xf32>, vector<16x32xf32> -> vector<16x32xf32>
    %c0_28 = arith.constant 0 : index
    %c0_29 = arith.constant 0 : index
    %96 = vector.load %arg4[%c0_28, %c0_29] : memref<8x32xf32, #tpu.memory_space<vmem>>, vector<8x32xf32>
    %cst_30 = arith.constant dense<0.000000e+00> : vector<16x32xf32>
    %97 = tpu.matmul %5, %96, %cst_30 {dimension_numbers = #tpu.dot_dimension_numbers<[1], [0], [0], [1], [0, 0, 1, 1], [], []>} : vector<16x8xf32>, vector<8x32xf32>, vector<16x32xf32> -> vector<16x32xf32>
    %98 = arith.mulf %95, %97 : vector<16x32xf32>
    %c0_31 = arith.constant 0 : index
    %c0_32 = arith.constant 0 : index
    %99 = vector.load %arg8[%c0_31, %c0_32] : memref<8x32xf32, #tpu.memory_space<vmem>>, vector<8x32xf32>
    %c0_33 = arith.constant 0 : index
    %c0_34 = arith.constant 0 : index
    %100 = vector.load %arg9[%c0_33, %c0_34] : memref<1x32xf32, #tpu.memory_space<vmem>>, vector<1x32xf32>
    %101 = tpu.iota {dimensions = array<i32: 0>} : vector<16x32xi32>
    %c8_i32_35 = arith.constant 8 : i32
    %c0_i32_36 = arith.constant 0 : i32
    %102 = arith.cmpi eq, %c8_i32_35, %c0_i32_36 : i32
    %c1_i32_37 = arith.constant 1 : i32
    %103 = arith.select %102, %c1_i32_37, %c8_i32_35 : i32
    %104 = vector.broadcast %103 : i32 to vector<16x32xi32>
    %105 = arith.remsi %101, %104 : vector<16x32xi32>
    %c0_i32_38 = arith.constant 0 : i32
    %106 = vector.broadcast %c0_i32_38 : i32 to vector<16x32xi32>
    %107 = arith.cmpi ne, %105, %106 : vector<16x32xi32>
    %c0_i32_39 = arith.constant 0 : i32
    %108 = vector.broadcast %c0_i32_39 : i32 to vector<16x32xi32>
    %109 = arith.cmpi slt, %105, %108 : vector<16x32xi32>
    %c0_i32_40 = arith.constant 0 : i32
    %110 = arith.cmpi slt, %103, %c0_i32_40 : i32
    %111 = vector.broadcast %110 : i1 to vector<16x32xi1>
    %112 = vector.broadcast %111 : vector<16x32xi1> to vector<16x32xi1>
    %113 = arith.xori %109, %112 : vector<16x32xi1>
    %114 = arith.andi %113, %107 : vector<16x32xi1>
    %115 = vector.broadcast %103 : i32 to vector<16x32xi32>
    %116 = arith.addi %105, %115 : vector<16x32xi32>
    %117 = arith.select %114, %116, %105 : vector<16x32xi1>, vector<16x32xi32>
    %118 = vector.extract_strided_slice %99 {offsets = [0, 0], sizes = [1, 32], strides = [1, 1]} : vector<8x32xf32> to vector<1x32xf32>
    %119 = vector.broadcast %118 : vector<1x32xf32> to vector<16x32xf32>
    %120 = arith.mulf %119, %98 : vector<16x32xf32>
    %c1_i32_41 = arith.constant 1 : i32
    %121 = tpu.dynamic_rotate %98 by %c1_i32_41 dim 0 : vector<16x32xf32>, i32 -> vector<16x32xf32>
    %c1_i32_42 = arith.constant 1 : i32
    %122 = vector.broadcast %c1_i32_42 : i32 to vector<16x32xi32>
    %123 = arith.cmpi sge, %117, %122 : vector<16x32xi32>
    %cst_43 = arith.constant 0.000000e+00 : f32
    %124 = vector.broadcast %cst_43 : f32 to vector<16x32xf32>
    %125 = arith.select %123, %121, %124 : vector<16x32xi1>, vector<16x32xf32>
    %126 = vector.extract_strided_slice %99 {offsets = [1, 0], sizes = [1, 32], strides = [1, 1]} : vector<8x32xf32> to vector<1x32xf32>
    %127 = vector.broadcast %126 : vector<1x32xf32> to vector<16x32xf32>
    %128 = arith.mulf %127, %125 : vector<16x32xf32>
    %129 = arith.addf %120, %128 : vector<16x32xf32>
    %c2_i32_44 = arith.constant 2 : i32
    %130 = tpu.dynamic_rotate %98 by %c2_i32_44 dim 0 : vector<16x32xf32>, i32 -> vector<16x32xf32>
    %c2_i32_45 = arith.constant 2 : i32
    %131 = vector.broadcast %c2_i32_45 : i32 to vector<16x32xi32>
    %132 = arith.cmpi sge, %117, %131 : vector<16x32xi32>
    %cst_46 = arith.constant 0.000000e+00 : f32
    %133 = vector.broadcast %cst_46 : f32 to vector<16x32xf32>
    %134 = arith.select %132, %130, %133 : vector<16x32xi1>, vector<16x32xf32>
    %135 = vector.extract_strided_slice %99 {offsets = [2, 0], sizes = [1, 32], strides = [1, 1]} : vector<8x32xf32> to vector<1x32xf32>
    %136 = vector.broadcast %135 : vector<1x32xf32> to vector<16x32xf32>
    %137 = arith.mulf %136, %134 : vector<16x32xf32>
    %138 = arith.addf %129, %137 : vector<16x32xf32>
    %c3_i32_47 = arith.constant 3 : i32
    %139 = tpu.dynamic_rotate %98 by %c3_i32_47 dim 0 : vector<16x32xf32>, i32 -> vector<16x32xf32>
    %c3_i32_48 = arith.constant 3 : i32
    %140 = vector.broadcast %c3_i32_48 : i32 to vector<16x32xi32>
    %141 = arith.cmpi sge, %117, %140 : vector<16x32xi32>
    %cst_49 = arith.constant 0.000000e+00 : f32
    %142 = vector.broadcast %cst_49 : f32 to vector<16x32xf32>
    %143 = arith.select %141, %139, %142 : vector<16x32xi1>, vector<16x32xf32>
    %144 = vector.extract_strided_slice %99 {offsets = [3, 0], sizes = [1, 32], strides = [1, 1]} : vector<8x32xf32> to vector<1x32xf32>
    %145 = vector.broadcast %144 : vector<1x32xf32> to vector<16x32xf32>
    %146 = arith.mulf %145, %143 : vector<16x32xf32>
    %147 = arith.addf %138, %146 : vector<16x32xf32>
    %c4_i32_50 = arith.constant 4 : i32
    %148 = tpu.dynamic_rotate %98 by %c4_i32_50 dim 0 : vector<16x32xf32>, i32 -> vector<16x32xf32>
    %c4_i32_51 = arith.constant 4 : i32
    %149 = vector.broadcast %c4_i32_51 : i32 to vector<16x32xi32>
    %150 = arith.cmpi sge, %117, %149 : vector<16x32xi32>
    %cst_52 = arith.constant 0.000000e+00 : f32
    %151 = vector.broadcast %cst_52 : f32 to vector<16x32xf32>
    %152 = arith.select %150, %148, %151 : vector<16x32xi1>, vector<16x32xf32>
    %153 = vector.extract_strided_slice %99 {offsets = [4, 0], sizes = [1, 32], strides = [1, 1]} : vector<8x32xf32> to vector<1x32xf32>
    %154 = vector.broadcast %153 : vector<1x32xf32> to vector<16x32xf32>
    %155 = arith.mulf %154, %152 : vector<16x32xf32>
    %156 = arith.addf %147, %155 : vector<16x32xf32>
    %c5_i32_53 = arith.constant 5 : i32
    %157 = tpu.dynamic_rotate %98 by %c5_i32_53 dim 0 : vector<16x32xf32>, i32 -> vector<16x32xf32>
    %c5_i32_54 = arith.constant 5 : i32
    %158 = vector.broadcast %c5_i32_54 : i32 to vector<16x32xi32>
    %159 = arith.cmpi sge, %117, %158 : vector<16x32xi32>
    %cst_55 = arith.constant 0.000000e+00 : f32
    %160 = vector.broadcast %cst_55 : f32 to vector<16x32xf32>
    %161 = arith.select %159, %157, %160 : vector<16x32xi1>, vector<16x32xf32>
    %162 = vector.extract_strided_slice %99 {offsets = [5, 0], sizes = [1, 32], strides = [1, 1]} : vector<8x32xf32> to vector<1x32xf32>
    %163 = vector.broadcast %162 : vector<1x32xf32> to vector<16x32xf32>
    %164 = arith.mulf %163, %161 : vector<16x32xf32>
    %165 = arith.addf %156, %164 : vector<16x32xf32>
    %c6_i32_56 = arith.constant 6 : i32
    %166 = tpu.dynamic_rotate %98 by %c6_i32_56 dim 0 : vector<16x32xf32>, i32 -> vector<16x32xf32>
    %c6_i32_57 = arith.constant 6 : i32
    %167 = vector.broadcast %c6_i32_57 : i32 to vector<16x32xi32>
    %168 = arith.cmpi sge, %117, %167 : vector<16x32xi32>
    %cst_58 = arith.constant 0.000000e+00 : f32
    %169 = vector.broadcast %cst_58 : f32 to vector<16x32xf32>
    %170 = arith.select %168, %166, %169 : vector<16x32xi1>, vector<16x32xf32>
    %171 = vector.extract_strided_slice %99 {offsets = [6, 0], sizes = [1, 32], strides = [1, 1]} : vector<8x32xf32> to vector<1x32xf32>
    %172 = vector.broadcast %171 : vector<1x32xf32> to vector<16x32xf32>
    %173 = arith.mulf %172, %170 : vector<16x32xf32>
    %174 = arith.addf %165, %173 : vector<16x32xf32>
    %c7_i32_59 = arith.constant 7 : i32
    %175 = tpu.dynamic_rotate %98 by %c7_i32_59 dim 0 : vector<16x32xf32>, i32 -> vector<16x32xf32>
    %c7_i32_60 = arith.constant 7 : i32
    %176 = vector.broadcast %c7_i32_60 : i32 to vector<16x32xi32>
    %177 = arith.cmpi sge, %117, %176 : vector<16x32xi32>
    %cst_61 = arith.constant 0.000000e+00 : f32
    %178 = vector.broadcast %cst_61 : f32 to vector<16x32xf32>
    %179 = arith.select %177, %175, %178 : vector<16x32xi1>, vector<16x32xf32>
    %180 = vector.extract_strided_slice %99 {offsets = [7, 0], sizes = [1, 32], strides = [1, 1]} : vector<8x32xf32> to vector<1x32xf32>
    %181 = vector.broadcast %180 : vector<1x32xf32> to vector<16x32xf32>
    %182 = arith.mulf %181, %179 : vector<16x32xf32>
    %183 = arith.addf %174, %182 : vector<16x32xf32>
    %184 = vector.broadcast %100 : vector<1x32xf32> to vector<16x32xf32>
    %185 = arith.mulf %184, %98 : vector<16x32xf32>
    %186 = arith.addf %183, %185 : vector<16x32xf32>
    %cst_62 = arith.constant dense<0.000000e+00> : vector<16x32xf32>
    %187 = tpu.matmul %3, %94, %cst_62 {dimension_numbers = #tpu.dot_dimension_numbers<[1], [0], [0], [1], [0, 0, 1, 1], [], []>} : vector<16x8xf32>, vector<8x32xf32>, vector<16x32xf32> -> vector<16x32xf32>
    %188 = arith.mulf %187, %186 : vector<16x32xf32>
    %c0_63 = arith.constant 0 : index
    %c0_64 = arith.constant 0 : index
    %189 = vector.load %arg5[%c0_63, %c0_64] : memref<32x8xf32, #tpu.memory_space<vmem>>, vector<32x8xf32>
    %cst_65 = arith.constant dense<0.000000e+00> : vector<16x8xf32>
    %190 = tpu.matmul %188, %189, %cst_65 {dimension_numbers = #tpu.dot_dimension_numbers<[1], [0], [0], [1], [0, 0, 1, 1], [], []>} : vector<16x32xf32>, vector<32x8xf32>, vector<16x8xf32> -> vector<16x8xf32>
    %191 = arith.truncf %190 : vector<16x8xf32> to vector<16x8xbf16>
    %c0_66 = arith.constant 0 : index
    %c0_67 = arith.constant 0 : index
    %192 = vector.load %arg2[%c0_66, %c0_67] : memref<8x8xbf16, #tpu.memory_space<vmem>>, vector<8x8xbf16>
    %cst_68 = arith.constant dense<0.000000e+00> : vector<16x8xf32>
    %193 = tpu.matmul %191, %192, %cst_68 {dimension_numbers = #tpu.dot_dimension_numbers<[1], [0], [0], [1], [0, 0, 1, 1], [], []>} : vector<16x8xbf16>, vector<8x8xbf16>, vector<16x8xf32> -> vector<16x8xf32>
    %c0_69 = arith.constant 0 : index
    %c0_70 = arith.constant 0 : index
    %194 = vector.load %arg10[%c0_69, %c0_70] : memref<16x8xf32, #tpu.memory_space<vmem>>, vector<16x8xf32>
    tpu.vector_store %arg10[%c0_69, %c0_70], %193 {strides = array<i32>} : memref<16x8xf32, #tpu.memory_space<vmem>>, vector<16x8xf32>,
    return
  }
}

</mosaic_0001>

<llo_original>
// kernel: tpu_custom_call.1
$region0: #{tpu_custom_call.1}
  #allocation0 [shape = 'u32[]', space=smem, size = 0x4, offset = 0x4, fixed_abs, tag = 'smem constant byte address 0x4 - core index']
  #allocation1 [shape = 'u32[144,128]{1,0:T(1,128)}', space=vmem, size = 0x12000, scoped, tag = 'internal scratch']
  %s0 = inlined_call_operand.vmem [shape: bf16[16,8], index: 0, kind: input, shape index: {}]
  %s1 = inlined_call_operand.vmem [shape: bf16[8,24], index: 1, kind: input, shape index: {}]
  %s2 = inlined_call_operand.vmem [shape: bf16[8,8], index: 2, kind: input, shape index: {}]
  %s3 = inlined_call_operand.vmem [shape: f32[8,32], index: 3, kind: input, shape index: {}]
  %s4 = inlined_call_operand.vmem [shape: f32[8,32], index: 4, kind: input, shape index: {}]
  %s5 = inlined_call_operand.vmem [shape: f32[32,8], index: 5, kind: input, shape index: {}]
  %s6 = inlined_call_operand.vmem [shape: f32[8,8], index: 6, kind: input, shape index: {}]
  %s7 = inlined_call_operand.vmem [shape: f32[1,8], index: 7, kind: input, shape index: {}]
  %s8 = inlined_call_operand.vmem [shape: f32[8,32], index: 8, kind: input, shape index: {}]
  %s9 = inlined_call_operand.vmem [shape: f32[1,32], index: 9, kind: input, shape index: {}]
  %s10 = inlined_call_operand.vmem [shape: f32[16,8], index: 10, kind: output, shape index: {}]
  %s11 = sld [smem:[#allocation0]]
  $region50: #{tpu_custom_call.1} parent=0
    _
  %s13 = ssub.s32 1, %s11
  %s14 = scalar_select 0, %s13, %s11
  // Predicated region
  $region2: #{tpu_custom_call.1} parent=0 // pred_check
    _
  $region3: #{tpu_custom_call.1} parent=0 // pred_check_branch
    %16 = sbr.rel (0) target = $region5
  $region4: #{tpu_custom_call.1} parent=0 // pred_region
    _
  $region5: #{tpu_custom_call.1} parent=0 // pred_fallthru
    _
  // Predicated region
  $region6: #{tpu_custom_call.1} parent=0 // pred_check
    _
  $region7: #{tpu_custom_call.1} parent=0 // pred_check_branch
    %18 = sbr.rel (0) target = $region9
  $region8: #{tpu_custom_call.1} parent=0 // pred_region
    _
  $region9: #{tpu_custom_call.1} parent=0 // pred_fallthru
    _
  // Predicated region
  $region10: #{tpu_custom_call.1} parent=0 // pred_check
    _
  $region11: #{tpu_custom_call.1} parent=0 // pred_check_branch
    %20 = sbr.rel (0) target = $region13
  $region12: #{tpu_custom_call.1} parent=0 // pred_region
    _
  $region13: #{tpu_custom_call.1} parent=0 // pred_fallthru
    _
  // Predicated region
  $region14: #{tpu_custom_call.1} parent=0 // pred_check
    _
  $region15: #{tpu_custom_call.1} parent=0 // pred_check_branch
    %22 = sbr.rel (0) target = $region17
  $region16: #{tpu_custom_call.1} parent=0 // pred_region
    _
  $region17: #{tpu_custom_call.1} parent=0 // pred_fallthru
    _
  // Predicated region
  $region18: #{tpu_custom_call.1} parent=0 // pred_check
    _
  $region19: #{tpu_custom_call.1} parent=0 // pred_check_branch
    %24 = sbr.rel (0) target = $region21
  $region20: #{tpu_custom_call.1} parent=0 // pred_region
    _
  $region21: #{tpu_custom_call.1} parent=0 // pred_fallthru
    _
  // Predicated region
  $region22: #{tpu_custom_call.1} parent=0 // pred_check
    _
  $region23: #{tpu_custom_call.1} parent=0 // pred_check_branch
    %26 = sbr.rel (0) target = $region25
  $region24: #{tpu_custom_call.1} parent=0 // pred_region
    _
  $region25: #{tpu_custom_call.1} parent=0 // pred_fallthru
    _
  // Predicated region
  $region26: #{tpu_custom_call.1} parent=0 // pred_check
    _
  $region27: #{tpu_custom_call.1} parent=0 // pred_check_branch
    %28 = sbr.rel (0) target = $region29
  $region28: #{tpu_custom_call.1} parent=0 // pred_region
    _
  $region29: #{tpu_custom_call.1} parent=0 // pred_fallthru
    _
  // Predicated region
  $region30: #{tpu_custom_call.1} parent=0 // pred_check
    _
  $region31: #{tpu_custom_call.1} parent=0 // pred_check_branch
    %30 = sbr.rel (0) target = $region33
  $region32: #{tpu_custom_call.1} parent=0 // pred_region
    _
  $region33: #{tpu_custom_call.1} parent=0 // pred_fallthru
    _
  // Predicated region
  $region34: #{tpu_custom_call.1} parent=0 // pred_check
    _
  $region35: #{tpu_custom_call.1} parent=0 // pred_check_branch
    %32 = sbr.rel (0) target = $region37
  $region36: #{tpu_custom_call.1} parent=0 // pred_region
    _
  $region37: #{tpu_custom_call.1} parent=0 // pred_fallthru
    _
  // Predicated region
  $region38: #{tpu_custom_call.1} parent=0 // pred_check
    _
  $region39: #{tpu_custom_call.1} parent=0 // pred_check_branch
    %34 = sbr.rel (0) target = $region41
  $region40: #{tpu_custom_call.1} parent=0 // pred_region
    _
  $region41: #{tpu_custom_call.1} parent=0 // pred_fallthru
    _
  %v36 = vld [vmem:[%s0] sm:$0xf]
  %v37 = vld [vmem:[%s0 + $0x4] sm:$0xf]
  %v38 = vld [vmem:[%s1] sm:$0xf]
  %v41 = vunpack.c.l.b16 %v36
  %v42 = vunpack.c.l.b16 %v37
  %v43 = vpack.c.b16 %v42, %v41
  %vm44 = vcmask 64512
  %v46 = vsel %vm44, %v43, 0
  %vm48 = vcmask 1043456
  %v50 = vsel %vm48, %v38, 0
  %52 = vmatprep.subr.bf16.mxu0 0
  %53 = vmatpush1.bf16.msra.mxu0 %v50
  %54 = vmatprep.subr.bf16.mxu0 0
  %55 = vmatpush1.bf16.msra.mxu0 0
  %56 = vmatprep.subr.bf16.mxu0 0
  %57 = vmatpush1.bf16.msra.mxu0 0
  %58 = vmatprep.subr.bf16.mxu0 0
  %59 = vmatpush1.bf16.msra.mxu0 0
  %60 = vmatprep.subr.bf16.mxu0 0
  %61 = vmatpush1.bf16.msra.mxu0 0
  %62 = vmatprep.subr.bf16.mxu0 0
  %63 = vmatpush1.bf16.msra.mxu0 0
  %64 = vmatprep.subr.bf16.mxu0 0
  %65 = vmatpush1.bf16.msra.mxu0 0
  %66 = vmatprep.subr.bf16.mxu0 0
  %67 = vmatpush1.bf16.msra.mxu0 0
  %68 = vmatprep.subr.bf16.mxu0 0
  %69 = vmatpush1.bf16.msra.mxu0 0
  %70 = vmatprep.subr.bf16.mxu0 0
  %71 = vmatpush1.bf16.msra.mxu0 0
  %72 = vmatprep.subr.bf16.mxu0 0
  %73 = vmatpush1.bf16.msra.mxu0 0
  %74 = vmatprep.subr.bf16.mxu0 0
  %75 = vmatpush1.bf16.msra.mxu0 0
  %76 = vmatprep.subr.bf16.mxu0 0
  %77 = vmatpush1.bf16.msra.mxu0 0
  %78 = vmatprep.subr.bf16.mxu0 0
  %79 = vmatpush1.bf16.msra.mxu0 0
  %80 = vmatprep.subr.bf16.mxu0 0
  %81 = vmatpush1.bf16.msra.mxu0 0
  %82 = vmatprep.subr.bf16.mxu0 0
  %83 = vmatpush1.bf16.msra.mxu0 0
  %84 = vmatprep.mubr.bf16.mxu0 0
  %85 = vmatmul.mubr.bf16.gmra.mrb[0].mxu0 %v46
  %v86 = vpop.f32.mrb[0].mxu0
  %v87 = vadd.f32 0.0, %v86
  %v88 = vpop.f32.mrb[0].mxu0
  %v89 = vpop.f32.mrb[0].mxu0
  %v90 = vadd.f32 0.0, %v89
  %v91 = vpop.f32.mrb[0].mxu0
  %92 = vdwg.mxu0
  %v93 = vld [vmem:[%s6] sm:$0xff]
  %v94 = vld [vmem:[%s7] sm:$0x1]
  %v95 = vlaneseq
  %v96 = vshrl.u32 %v95, 7
  %v97 = vadd.s32 %v96, 8
  %vm98 = vcmp.lt.s32.totalorder %v96, 0
  %v99 = vsub.s32 0, %v96
  %v100 = vsel %vm98, %v99, %v96
  %v101 = vshrl.u32 %v100, 3
  %v102 = vand.u32 %v100, 7
  %v103 = vsub.s32 0, %v102
  %v104 = vsel %vm98, %v103, %v102
  %vm105 = vcmp.lt.s32.totalorder %v97, 0
  %v106 = vsub.s32 0, %v97
  %v107 = vsel %vm105, %v106, %v97
  %v108 = vshrl.u32 %v107, 3
  %v109 = vand.u32 %v107, 7
  %v110 = vsub.s32 0, %v109
  %v111 = vsel %vm105, %v110, %v109
  %vm112 = vcmp.ne.s32.totalorder %v104, 0
  %vm113 = vcmp.ne.s32.totalorder %v111, 0
  %vm114 = vcmp.lt.s32.totalorder %v104, 0
  %vm115 = vcmp.lt.s32.totalorder %v111, 0
  %vm116 = vmand %vm114, %vm112
  %vm117 = vmand %vm115, %vm113
  %v118 = vadd.s32 %v104, 8
  %v119 = vadd.s32 %v111, 8
  %v120 = vsel %vm116, %v118, %v104
  %v121 = vsel %vm117, %v119, %v111
  %v122 = vlaneseq
  %v123 = vshrl.u32 %v122, 7
  %v124 = vsub.s32 0, %v123
  %v125 = vrot.slane %v93, %v124
  %128 = vrot.lane.b32.xlu0 %v87, 120
  %v129 = vpop.permute.xlu0 %128
  %130 = vrot.lane.b32.xlu0 %v90, 120
  %v131 = vpop.permute.xlu0 %130
  %v134 = vmul.f32 %v125, %v129
  %v135 = vmul.f32 %v125, %v131
  %v136 = vrot.slane %v129, 7
  %v137 = vrot.slane %v131, 7
  %vm138 = vcmp.lt.s32.totalorder %v96, 1
  %v139 = vsel %vm138, %v136, %v137
  %v140 = vsel %vm138, %v137, %v136
  %vm141 = vcmp.ge.s32.totalorder %v120, 1
  %vm142 = vcmp.ge.s32.totalorder %v121, 1
  %v143 = vsel %vm141, %v140, 0.0
  %v144 = vsel %vm142, %v139, 0.0
  %v145 = vlaneseq
  %v146 = vshrl.u32 %v145, 7
  %v147 = vsub.s32 1, %v146
  %v148 = vrot.slane %v93, %v147
  %v149 = vmul.f32 %v148, %v143
  %v150 = vmul.f32 %v148, %v144
  %v151 = vadd.f32 %v134, %v149
  %v152 = vadd.f32 %v135, %v150
  %v153 = vrot.slane %v129, 6
  %v154 = vrot.slane %v131, 6
  %vm155 = vcmp.lt.s32.totalorder %v96, 2
  %v156 = vsel %vm155, %v153, %v154
  %v157 = vsel %vm155, %v154, %v153
  %vm158 = vcmp.ge.s32.totalorder %v120, 2
  %vm159 = vcmp.ge.s32.totalorder %v121, 2
  %v160 = vsel %vm158, %v157, 0.0
  %v161 = vsel %vm159, %v156, 0.0
  %v162 = vlaneseq
  %v163 = vshrl.u32 %v162, 7
  %v164 = vsub.s32 2, %v163
  %v165 = vrot.slane %v93, %v164
  %v166 = vmul.f32 %v165, %v160
  %v167 = vmul.f32 %v165, %v161
  %v168 = vadd.f32 %v151, %v166
  %v169 = vadd.f32 %v152, %v167
  %v170 = vrot.slane %v129, 5
  %v171 = vrot.slane %v131, 5
  %vm172 = vcmp.lt.s32.totalorder %v96, 3
  %v173 = vsel %vm172, %v170, %v171
  %v174 = vsel %vm172, %v171, %v170
  %vm175 = vcmp.ge.s32.totalorder %v120, 3
  %vm176 = vcmp.ge.s32.totalorder %v121, 3
  %v177 = vsel %vm175, %v174, 0.0
  %v178 = vsel %vm176, %v173, 0.0
  %v179 = vlaneseq
  %v180 = vshrl.u32 %v179, 7
  %v181 = vsub.s32 3, %v180
  %v182 = vrot.slane %v93, %v181
  %v183 = vmul.f32 %v182, %v177
  %v184 = vmul.f32 %v182, %v178
  %v185 = vadd.f32 %v168, %v183
  %v186 = vadd.f32 %v169, %v184
  %v187 = vrot.slane %v129, 4
  %v188 = vrot.slane %v131, 4
  %vm189 = vcmp.lt.s32.totalorder %v96, 4
  %v190 = vsel %vm189, %v187, %v188
  %v191 = vsel %vm189, %v188, %v187
  %vm192 = vcmp.ge.s32.totalorder %v120, 4
  %vm193 = vcmp.ge.s32.totalorder %v121, 4
  %v194 = vsel %vm192, %v191, 0.0
  %v195 = vsel %vm193, %v190, 0.0
  %v196 = vlaneseq
  %v197 = vshrl.u32 %v196, 7
  %v198 = vsub.s32 4, %v197
  %v199 = vrot.slane %v93, %v198
  %v200 = vmul.f32 %v199, %v194
  %v201 = vmul.f32 %v199, %v195
  %v202 = vadd.f32 %v185, %v200
  %v203 = vadd.f32 %v186, %v201
  %v204 = vrot.slane %v129, 3
  %v205 = vrot.slane %v131, 3
  %vm206 = vcmp.lt.s32.totalorder %v96, 5
  %v207 = vsel %vm206, %v204, %v205
  %v208 = vsel %vm206, %v205, %v204
  %vm209 = vcmp.ge.s32.totalorder %v120, 5
  %vm210 = vcmp.ge.s32.totalorder %v121, 5
  %v211 = vsel %vm209, %v208, 0.0
  %v212 = vsel %vm210, %v207, 0.0
  %v213 = vlaneseq
  %v214 = vshrl.u32 %v213, 7
  %v215 = vsub.s32 5, %v214
  %v216 = vrot.slane %v93, %v215
  %v217 = vmul.f32 %v216, %v211
  %v218 = vmul.f32 %v216, %v212
  %v219 = vadd.f32 %v202, %v217
  %v220 = vadd.f32 %v203, %v218
  %v221 = vrot.slane %v129, 2
  %v222 = vrot.slane %v131, 2
  %vm223 = vcmp.lt.s32.totalorder %v96, 6
  %v224 = vsel %vm223, %v221, %v222
  %v225 = vsel %vm223, %v222, %v221
  %vm226 = vcmp.ge.s32.totalorder %v120, 6
  %vm227 = vcmp.ge.s32.totalorder %v121, 6
  %v228 = vsel %vm226, %v225, 0.0
  %v229 = vsel %vm227, %v224, 0.0
  %v230 = vlaneseq
  %v231 = vshrl.u32 %v230, 7
  %v232 = vsub.s32 6, %v231
  %v233 = vrot.slane %v93, %v232
  %v234 = vmul.f32 %v233, %v228
  %v235 = vmul.f32 %v233, %v229
  %v236 = vadd.f32 %v219, %v234
  %v237 = vadd.f32 %v220, %v235
  %v238 = vrot.slane %v129, 1
  %v239 = vrot.slane %v131, 1
  %vm240 = vcmp.lt.s32.totalorder %v96, 7
  %v241 = vsel %vm240, %v238, %v239
  %v242 = vsel %vm240, %v239, %v238
  %vm243 = vcmp.ge.s32.totalorder %v120, 7
  %vm244 = vcmp.ge.s32.totalorder %v121, 7
  %v245 = vsel %vm243, %v242, 0.0
  %v246 = vsel %vm244, %v241, 0.0
  %v247 = vlaneseq
  %v248 = vshrl.u32 %v247, 7
  %v249 = vsub.s32 7, %v248
  %v250 = vrot.slane %v93, %v249
  %v251 = vmul.f32 %v250, %v245
  %v252 = vmul.f32 %v250, %v246
  %v253 = vadd.f32 %v236, %v251
  %v254 = vadd.f32 %v237, %v252
  %v256 = vlaneseq
  %v257 = vshrl.u32 %v256, 7
  %v258 = vsub.s32 0, %v257
  %v259 = vrot.slane %v94, %v258
  %v261 = vmul.f32 %v259, %v129
  %v262 = vmul.f32 %v259, %v131
  %v263 = vadd.f32 %v253, %v261
  %v264 = vadd.f32 %v254, %v262
  %v265 = vld [vmem:[%s3] sm:$0xff]
  %v267 = vsel %vm44, %v263, 0
  %v270 = vsel %vm44, %v264, 0
  %272 = vmatprep.subr.mxu0 0.0
  %273 = vmatpush1.msra.mxu0 %v265
  %274 = vmatprep.subr.mxu0 0.0
  %275 = vmatpush1.msra.mxu0 0.0
  %276 = vmatprep.subr.mxu0 0.0
  %277 = vmatpush1.msra.mxu0 0.0
  %278 = vmatprep.subr.mxu0 0.0
  %279 = vmatpush1.msra.mxu0 0.0
  %280 = vmatprep.subr.mxu0 0.0
  %281 = vmatpush1.msra.mxu0 0.0
  %282 = vmatprep.subr.mxu0 0.0
  %283 = vmatpush1.msra.mxu0 0.0
  %284 = vmatprep.subr.mxu0 0.0
  %285 = vmatpush1.msra.mxu0 0.0
  %286 = vmatprep.subr.mxu0 0.0
  %287 = vmatpush1.msra.mxu0 0.0
  %288 = vmatprep.subr.mxu0 0.0
  %289 = vmatpush1.msra.mxu0 0.0
  %290 = vmatprep.subr.mxu0 0.0
  %291 = vmatpush1.msra.mxu0 0.0
  %292 = vmatprep.subr.mxu0 0.0
  %293 = vmatpush1.msra.mxu0 0.0
  %294 = vmatprep.subr.mxu0 0.0
  %295 = vmatpush1.msra.mxu0 0.0
  %296 = vmatprep.subr.mxu0 0.0
  %297 = vmatpush1.msra.mxu0 0.0
  %298 = vmatprep.subr.mxu0 0.0
  %299 = vmatpush1.msra.mxu0 0.0
  %300 = vmatprep.subr.mxu0 0.0
  %301 = vmatpush1.msra.mxu0 0.0
  %302 = vmatprep.subr.mxu0 0.0
  %303 = vmatpush1.msra.mxu0 0.0
  %304 = vmatprep.subr.mxu0 0.0
  %305 = vmatpush1.msra.mxu0 0.0
  %306 = vmatprep.subr.mxu0 0.0
  %307 = vmatpush1.msra.mxu0 0.0
  %308 = vmatprep.subr.mxu0 0.0
  %309 = vmatpush1.msra.mxu0 0.0
  %310 = vmatprep.subr.mxu0 0.0
  %311 = vmatpush1.msra.mxu0 0.0
  %312 = vmatprep.subr.mxu0 0.0
  %313 = vmatpush1.msra.mxu0 0.0
  %314 = vmatprep.subr.mxu0 0.0
  %315 = vmatpush1.msra.mxu0 0.0
  %316 = vmatprep.subr.mxu0 0.0
  %317 = vmatpush1.msra.mxu0 0.0
  %318 = vmatprep.subr.mxu0 0.0
  %319 = vmatpush1.msra.mxu0 0.0
  %320 = vmatprep.subr.mxu0 0.0
  %321 = vmatpush1.msra.mxu0 0.0
  %322 = vmatprep.subr.mxu0 0.0
  %323 = vmatpush1.msra.mxu0 0.0
  %324 = vmatprep.subr.mxu0 0.0
  %325 = vmatpush1.msra.mxu0 0.0
  %326 = vmatprep.subr.mxu0 0.0
  %327 = vmatpush1.msra.mxu0 0.0
  %328 = vmatprep.subr.mxu0 0.0
  %329 = vmatpush1.msra.mxu0 0.0
  %330 = vmatprep.subr.mxu0 0.0
  %331 = vmatpush1.msra.mxu0 0.0
  %332 = vmatprep.subr.mxu0 0.0
  %333 = vmatpush1.msra.mxu0 0.0
  %334 = vmatprep.subr.mxu0 0.0
  %335 = vmatpush1.msra.mxu0 0.0
  %336 = vmatprep.mubr.f32.mxu0 0.0
  %337 = vmatmul.mubr.f32.gmra.mrb[0].mxu0 %v267
  %v338 = vpop.f32.mrb[0].mxu0
  %v339 = vadd.f32 0.0, %v338
  %v340 = vpop.f32.mrb[0].mxu0
  %341 = vmatprep.mubr.f32.mxu0 0.0
  %342 = vmatmul.mubr.f32.gmra.mrb[0].mxu0 %v270
  %v343 = vpop.f32.mrb[0].mxu0
  %v344 = vadd.f32 0.0, %v343
  %v345 = vpop.f32.mrb[0].mxu0
  %346 = vdwg.mxu0
  %v347 = vld [vmem:[%s4] sm:$0xff]
  %348 = vrot.lane.b32.xlu0 %v87, 112
  %v349 = vpop.permute.xlu0 %348
  %350 = vrot.lane.b32.xlu0 %v90, 112
  %v351 = vpop.permute.xlu0 %350
  %v352 = vsel %vm44, %v349, 0
  %v354 = vsel %vm44, %v351, 0
  %356 = vmatprep.subr.mxu0 0.0
  %357 = vmatpush1.msra.mxu0 %v347
  %358 = vmatprep.subr.mxu0 0.0
  %359 = vmatpush1.msra.mxu0 0.0
  %360 = vmatprep.subr.mxu0 0.0
  %361 = vmatpush1.msra.mxu0 0.0
  %362 = vmatprep.subr.mxu0 0.0
  %363 = vmatpush1.msra.mxu0 0.0
  %364 = vmatprep.subr.mxu0 0.0
  %365 = vmatpush1.msra.mxu0 0.0
  %366 = vmatprep.subr.mxu0 0.0
  %367 = vmatpush1.msra.mxu0 0.0
  %368 = vmatprep.subr.mxu0 0.0
  %369 = vmatpush1.msra.mxu0 0.0
  %370 = vmatprep.subr.mxu0 0.0
  %371 = vmatpush1.msra.mxu0 0.0
  %372 = vmatprep.subr.mxu0 0.0
  %373 = vmatpush1.msra.mxu0 0.0
  %374 = vmatprep.subr.mxu0 0.0
  %375 = vmatpush1.msra.mxu0 0.0
  %376 = vmatprep.subr.mxu0 0.0
  %377 = vmatpush1.msra.mxu0 0.0
  %378 = vmatprep.subr.mxu0 0.0
  %379 = vmatpush1.msra.mxu0 0.0
  %380 = vmatprep.subr.mxu0 0.0
  %381 = vmatpush1.msra.mxu0 0.0
  %382 = vmatprep.subr.mxu0 0.0
  %383 = vmatpush1.msra.mxu0 0.0
  %384 = vmatprep.subr.mxu0 0.0
  %385 = vmatpush1.msra.mxu0 0.0
  %386 = vmatprep.subr.mxu0 0.0
  %387 = vmatpush1.msra.mxu0 0.0
  %388 = vmatprep.subr.mxu0 0.0
  %389 = vmatpush1.msra.mxu0 0.0
  %390 = vmatprep.subr.mxu0 0.0
  %391 = vmatpush1.msra.mxu0 0.0
  %392 = vmatprep.subr.mxu0 0.0
  %393 = vmatpush1.msra.mxu0 0.0
  %394 = vmatprep.subr.mxu0 0.0
  %395 = vmatpush1.msra.mxu0 0.0
  %396 = vmatprep.subr.mxu0 0.0
  %397 = vmatpush1.msra.mxu0 0.0
  %398 = vmatprep.subr.mxu0 0.0
  %399 = vmatpush1.msra.mxu0 0.0
  %400 = vmatprep.subr.mxu0 0.0
  %401 = vmatpush1.msra.mxu0 0.0
  %402 = vmatprep.subr.mxu0 0.0
  %403 = vmatpush1.msra.mxu0 0.0
  %404 = vmatprep.subr.mxu0 0.0
  %405 = vmatpush1.msra.mxu0 0.0
  %406 = vmatprep.subr.mxu0 0.0
  %407 = vmatpush1.msra.mxu0 0.0
  %408 = vmatprep.subr.mxu0 0.0
  %409 = vmatpush1.msra.mxu0 0.0
  %410 = vmatprep.subr.mxu0 0.0
  %411 = vmatpush1.msra.mxu0 0.0
  %412 = vmatprep.subr.mxu0 0.0
  %413 = vmatpush1.msra.mxu0 0.0
  %414 = vmatprep.subr.mxu0 0.0
  %415 = vmatpush1.msra.mxu0 0.0
  %416 = vmatprep.subr.mxu0 0.0
  %417 = vmatpush1.msra.mxu0 0.0
  %418 = vmatprep.subr.mxu0 0.0
  %419 = vmatpush1.msra.mxu0 0.0
  %420 = vmatprep.mubr.f32.mxu0 0.0
  %421 = vmatmul.mubr.f32.gmra.mrb[0].mxu0 %v352
  %v422 = vpop.f32.mrb[0].mxu0
  %v423 = vadd.f32 0.0, %v422
  %v424 = vpop.f32.mrb[0].mxu0
  %425 = vmatprep.mubr.f32.mxu0 0.0
  %426 = vmatmul.mubr.f32.gmra.mrb[0].mxu0 %v354
  %v427 = vpop.f32.mrb[0].mxu0
  %v428 = vadd.f32 0.0, %v427
  %v429 = vpop.f32.mrb[0].mxu0
  %430 = vdwg.mxu0
  %v431 = vmul.f32 %v339, %v423
  %v432 = vmul.f32 %v344, %v428
  %v433 = vld [vmem:[%s8] sm:$0xff]
  %v434 = vld [vmem:[%s9] sm:$0x1]
  %v435 = vlaneseq
  %v436 = vshrl.u32 %v435, 7
  %v437 = vsub.s32 0, %v436
  %v438 = vrot.slane %v433, %v437
  %v439 = vmul.f32 %v438, %v431
  %v440 = vmul.f32 %v438, %v432
  %v441 = vrot.slane %v431, 7
  %v442 = vrot.slane %v432, 7
  %v443 = vsel %vm138, %v441, %v442
  %v444 = vsel %vm138, %v442, %v441
  %v445 = vsel %vm141, %v444, 0.0
  %v446 = vsel %vm142, %v443, 0.0
  %v447 = vlaneseq
  %v448 = vshrl.u32 %v447, 7
  %v449 = vsub.s32 1, %v448
  %v450 = vrot.slane %v433, %v449
  %v451 = vmul.f32 %v450, %v445
  %v452 = vmul.f32 %v450, %v446
  %v453 = vadd.f32 %v439, %v451
  %v454 = vadd.f32 %v440, %v452
  %v455 = vrot.slane %v431, 6
  %v456 = vrot.slane %v432, 6
  %v457 = vsel %vm155, %v455, %v456
  %v458 = vsel %vm155, %v456, %v455
  %v459 = vsel %vm158, %v458, 0.0
  %v460 = vsel %vm159, %v457, 0.0
  %v461 = vlaneseq
  %v462 = vshrl.u32 %v461, 7
  %v463 = vsub.s32 2, %v462
  %v464 = vrot.slane %v433, %v463
  %v465 = vmul.f32 %v464, %v459
  %v466 = vmul.f32 %v464, %v460
  %v467 = vadd.f32 %v453, %v465
  %v468 = vadd.f32 %v454, %v466
  %v469 = vrot.slane %v431, 5
  %v470 = vrot.slane %v432, 5
  %v471 = vsel %vm172, %v469, %v470
  %v472 = vsel %vm172, %v470, %v469
  %v473 = vsel %vm175, %v472, 0.0
  %v474 = vsel %vm176, %v471, 0.0
  %v475 = vlaneseq
  %v476 = vshrl.u32 %v475, 7
  %v477 = vsub.s32 3, %v476
  %v478 = vrot.slane %v433, %v477
  %v479 = vmul.f32 %v478, %v473
  %v480 = vmul.f32 %v478, %v474
  %v481 = vadd.f32 %v467, %v479
  %v482 = vadd.f32 %v468, %v480
  %v483 = vrot.slane %v431, 4
  %v484 = vrot.slane %v432, 4
  %v485 = vsel %vm189, %v483, %v484
  %v486 = vsel %vm189, %v484, %v483
  %v487 = vsel %vm192, %v486, 0.0
  %v488 = vsel %vm193, %v485, 0.0
  %v489 = vlaneseq
  %v490 = vshrl.u32 %v489, 7
  %v491 = vsub.s32 4, %v490
  %v492 = vrot.slane %v433, %v491
  %v493 = vmul.f32 %v492, %v487
  %v494 = vmul.f32 %v492, %v488
  %v495 = vadd.f32 %v481, %v493
  %v496 = vadd.f32 %v482, %v494
  %v497 = vrot.slane %v431, 3
  %v498 = vrot.slane %v432, 3
  %v499 = vsel %vm206, %v497, %v498
  %v500 = vsel %vm206, %v498, %v497
  %v501 = vsel %vm209, %v500, 0.0
  %v502 = vsel %vm210, %v499, 0.0
  %v503 = vlaneseq
  %v504 = vshrl.u32 %v503, 7
  %v505 = vsub.s32 5, %v504
  %v506 = vrot.slane %v433, %v505
  %v507 = vmul.f32 %v506, %v501
  %v508 = vmul.f32 %v506, %v502
  %v509 = vadd.f32 %v495, %v507
  %v510 = vadd.f32 %v496, %v508
  %v511 = vrot.slane %v431, 2
  %v512 = vrot.slane %v432, 2
  %v513 = vsel %vm223, %v511, %v512
  %v514 = vsel %vm223, %v512, %v511
  %v515 = vsel %vm226, %v514, 0.0
  %v516 = vsel %vm227, %v513, 0.0
  %v517 = vlaneseq
  %v518 = vshrl.u32 %v517, 7
  %v519 = vsub.s32 6, %v518
  %v520 = vrot.slane %v433, %v519
  %v521 = vmul.f32 %v520, %v515
  %v522 = vmul.f32 %v520, %v516
  %v523 = vadd.f32 %v509, %v521
  %v524 = vadd.f32 %v510, %v522
  %v525 = vrot.slane %v431, 1
  %v526 = vrot.slane %v432, 1
  %v527 = vsel %vm240, %v525, %v526
  %v528 = vsel %vm240, %v526, %v525
  %v529 = vsel %vm243, %v528, 0.0
  %v530 = vsel %vm244, %v527, 0.0
  %v531 = vlaneseq
  %v532 = vshrl.u32 %v531, 7
  %v533 = vsub.s32 7, %v532
  %v534 = vrot.slane %v433, %v533
  %v535 = vmul.f32 %v534, %v529
  %v536 = vmul.f32 %v534, %v530
  %v537 = vadd.f32 %v523, %v535
  %v538 = vadd.f32 %v524, %v536
  %v540 = vlaneseq
  %v541 = vshrl.u32 %v540, 7
  %v542 = vsub.s32 0, %v541
  %v543 = vrot.slane %v434, %v542
  %v545 = vmul.f32 %v543, %v431
  %v546 = vmul.f32 %v543, %v432
  %v547 = vadd.f32 %v537, %v545
  %v548 = vadd.f32 %v538, %v546
  %v549 = vsel %vm44, %v87, 0
  %v551 = vsel %vm44, %v90, 0
  %553 = vmatprep.subr.mxu0 0.0
  %554 = vmatpush1.msra.mxu0 %v265
  %555 = vmatprep.subr.mxu0 0.0
  %556 = vmatpush1.msra.mxu0 0.0
  %557 = vmatprep.subr.mxu0 0.0
  %558 = vmatpush1.msra.mxu0 0.0
  %559 = vmatprep.subr.mxu0 0.0
  %560 = vmatpush1.msra.mxu0 0.0
  %561 = vmatprep.subr.mxu0 0.0
  %562 = vmatpush1.msra.mxu0 0.0
  %563 = vmatprep.subr.mxu0 0.0
  %564 = vmatpush1.msra.mxu0 0.0
  %565 = vmatprep.subr.mxu0 0.0
  %566 = vmatpush1.msra.mxu0 0.0
  %567 = vmatprep.subr.mxu0 0.0
  %568 = vmatpush1.msra.mxu0 0.0
  %569 = vmatprep.subr.mxu0 0.0
  %570 = vmatpush1.msra.mxu0 0.0
  %571 = vmatprep.subr.mxu0 0.0
  %572 = vmatpush1.msra.mxu0 0.0
  %573 = vmatprep.subr.mxu0 0.0
  %574 = vmatpush1.msra.mxu0 0.0
  %575 = vmatprep.subr.mxu0 0.0
  %576 = vmatpush1.msra.mxu0 0.0
  %577 = vmatprep.subr.mxu0 0.0
  %578 = vmatpush1.msra.mxu0 0.0
  %579 = vmatprep.subr.mxu0 0.0
  %580 = vmatpush1.msra.mxu0 0.0
  %581 = vmatprep.subr.mxu0 0.0
  %582 = vmatpush1.msra.mxu0 0.0
  %583 = vmatprep.subr.mxu0 0.0
  %584 = vmatpush1.msra.mxu0 0.0
  %585 = vmatprep.subr.mxu0 0.0
  %586 = vmatpush1.msra.mxu0 0.0
  %587 = vmatprep.subr.mxu0 0.0
  %588 = vmatpush1.msra.mxu0 0.0
  %589 = vmatprep.subr.mxu0 0.0
  %590 = vmatpush1.msra.mxu0 0.0
  %591 = vmatprep.subr.mxu0 0.0
  %592 = vmatpush1.msra.mxu0 0.0
  %593 = vmatprep.subr.mxu0 0.0
  %594 = vmatpush1.msra.mxu0 0.0
  %595 = vmatprep.subr.mxu0 0.0
  %596 = vmatpush1.msra.mxu0 0.0
  %597 = vmatprep.subr.mxu0 0.0
  %598 = vmatpush1.msra.mxu0 0.0
  %599 = vmatprep.subr.mxu0 0.0
  %600 = vmatpush1.msra.mxu0 0.0
  %601 = vmatprep.subr.mxu0 0.0
  %602 = vmatpush1.msra.mxu0 0.0
  %603 = vmatprep.subr.mxu0 0.0
  %604 = vmatpush1.msra.mxu0 0.0
  %605 = vmatprep.subr.mxu0 0.0
  %606 = vmatpush1.msra.mxu0 0.0
  %607 = vmatprep.subr.mxu0 0.0
  %608 = vmatpush1.msra.mxu0 0.0
  %609 = vmatprep.subr.mxu0 0.0
  %610 = vmatpush1.msra.mxu0 0.0
  %611 = vmatprep.subr.mxu0 0.0
  %612 = vmatpush1.msra.mxu0 0.0
  %613 = vmatprep.subr.mxu0 0.0
  %614 = vmatpush1.msra.mxu0 0.0
  %615 = vmatprep.subr.mxu0 0.0
  %616 = vmatpush1.msra.mxu0 0.0
  %617 = vmatprep.mubr.f32.mxu0 0.0
  %618 = vmatmul.mubr.f32.gmra.mrb[0].mxu0 %v549
  %v619 = vpop.f32.mrb[0].mxu0
  %v620 = vadd.f32 0.0, %v619
  %v621 = vpop.f32.mrb[0].mxu0
  %622 = vmatprep.mubr.f32.mxu0 0.0
  %623 = vmatmul.mubr.f32.gmra.mrb[0].mxu0 %v551
  %v624 = vpop.f32.mrb[0].mxu0
  %v625 = vadd.f32 0.0, %v624
  %v626 = vpop.f32.mrb[0].mxu0
  %627 = vdwg.mxu0
  %v628 = vmul.f32 %v620, %v547
  %v629 = vmul.f32 %v625, %v548
  %v630 = vld [vmem:[%s5] sm:$0xff]
  %v631 = vld [vmem:[%s5 + $0x8] sm:$0xff]
  %v632 = vld [vmem:[%s5 + $0x10] sm:$0xff]
  %v633 = vld [vmem:[%s5 + $0x18] sm:$0xff]
  %vm634 = vcmask 261120
  %v636 = vsel %vm634, %v628, 0
  %v639 = vsel %vm634, %v629, 0
  %641 = vmatprep.subr.mxu0 0.0
  %642 = vmatpush1.msra.mxu0 %v630
  %643 = vmatprep.subr.mxu0 0.0
  %644 = vmatpush1.msra.mxu0 %v631
  %645 = vmatprep.subr.mxu0 0.0
  %646 = vmatpush1.msra.mxu0 %v632
  %647 = vmatprep.subr.mxu0 0.0
  %648 = vmatpush1.msra.mxu0 %v633
  %649 = vmatprep.subr.mxu0 0.0
  %650 = vmatpush1.msra.mxu0 0.0
  %651 = vmatprep.subr.mxu0 0.0
  %652 = vmatpush1.msra.mxu0 0.0
  %653 = vmatprep.subr.mxu0 0.0
  %654 = vmatpush1.msra.mxu0 0.0
  %655 = vmatprep.subr.mxu0 0.0
  %656 = vmatpush1.msra.mxu0 0.0
  %657 = vmatprep.subr.mxu0 0.0
  %658 = vmatpush1.msra.mxu0 0.0
  %659 = vmatprep.subr.mxu0 0.0
  %660 = vmatpush1.msra.mxu0 0.0
  %661 = vmatprep.subr.mxu0 0.0
  %662 = vmatpush1.msra.mxu0 0.0
  %663 = vmatprep.subr.mxu0 0.0
  %664 = vmatpush1.msra.mxu0 0.0
  %665 = vmatprep.subr.mxu0 0.0
  %666 = vmatpush1.msra.mxu0 0.0
  %667 = vmatprep.subr.mxu0 0.0
  %668 = vmatpush1.msra.mxu0 0.0
  %669 = vmatprep.subr.mxu0 0.0
  %670 = vmatpush1.msra.mxu0 0.0
  %671 = vmatprep.subr.mxu0 0.0
  %672 = vmatpush1.msra.mxu0 0.0
  %673 = vmatprep.subr.mxu0 0.0
  %674 = vmatpush1.msra.mxu0 0.0
  %675 = vmatprep.subr.mxu0 0.0
  %676 = vmatpush1.msra.mxu0 0.0
  %677 = vmatprep.subr.mxu0 0.0
  %678 = vmatpush1.msra.mxu0 0.0
  %679 = vmatprep.subr.mxu0 0.0
  %680 = vmatpush1.msra.mxu0 0.0
  %681 = vmatprep.subr.mxu0 0.0
  %682 = vmatpush1.msra.mxu0 0.0
  %683 = vmatprep.subr.mxu0 0.0
  %684 = vmatpush1.msra.mxu0 0.0
  %685 = vmatprep.subr.mxu0 0.0
  %686 = vmatpush1.msra.mxu0 0.0
  %687 = vmatprep.subr.mxu0 0.0
  %688 = vmatpush1.msra.mxu0 0.0
  %689 = vmatprep.subr.mxu0 0.0
  %690 = vmatpush1.msra.mxu0 0.0
  %691 = vmatprep.subr.mxu0 0.0
  %692 = vmatpush1.msra.mxu0 0.0
  %693 = vmatprep.subr.mxu0 0.0
  %694 = vmatpush1.msra.mxu0 0.0
  %695 = vmatprep.subr.mxu0 0.0
  %696 = vmatpush1.msra.mxu0 0.0
  %697 = vmatprep.subr.mxu0 0.0
  %698 = vmatpush1.msra.mxu0 0.0
  %699 = vmatprep.subr.mxu0 0.0
  %700 = vmatpush1.msra.mxu0 0.0
  %701 = vmatprep.subr.mxu0 0.0
  %702 = vmatpush1.msra.mxu0 0.0
  %703 = vmatprep.subr.mxu0 0.0
  %704 = vmatpush1.msra.mxu0 0.0
  %705 = vmatprep.mubr.f32.mxu0 0.0
  %706 = vmatmul.mubr.f32.gmra.mrb[0].mxu0 %v636
  %v707 = vpop.f32.mrb[0].mxu0
  %v708 = vadd.f32 0.0, %v707
  %v709 = vpop.f32.mrb[0].mxu0
  %710 = vmatprep.mubr.f32.mxu0 0.0
  %711 = vmatmul.mubr.f32.gmra.mrb[0].mxu0 %v639
  %v712 = vpop.f32.mrb[0].mxu0
  %v713 = vadd.f32 0.0, %v712
  %v714 = vpop.f32.mrb[0].mxu0
  %715 = vdwg.mxu0
  %v716 = vpack.c.bf16 %v713, %v708
  %v717 = vld [vmem:[%s2] sm:$0xf]
  %v719 = vsel %vm44, %v716, 0
  %v722 = vsel %vm48, %v717, 0
  %724 = vmatprep.subr.bf16.mxu0 0
  %725 = vmatpush1.bf16.msra.mxu0 %v722
  %726 = vmatprep.subr.bf16.mxu0 0
  %727 = vmatpush1.bf16.msra.mxu0 0
  %728 = vmatprep.subr.bf16.mxu0 0
  %729 = vmatpush1.bf16.msra.mxu0 0
  %730 = vmatprep.subr.bf16.mxu0 0
  %731 = vmatpush1.bf16.msra.mxu0 0
  %732 = vmatprep.subr.bf16.mxu0 0
  %733 = vmatpush1.bf16.msra.mxu0 0
  %734 = vmatprep.subr.bf16.mxu0 0
  %735 = vmatpush1.bf16.msra.mxu0 0
  %736 = vmatprep.subr.bf16.mxu0 0
  %737 = vmatpush1.bf16.msra.mxu0 0
  %738 = vmatprep.subr.bf16.mxu0 0
  %739 = vmatpush1.bf16.msra.mxu0 0
  %740 = vmatprep.subr.bf16.mxu0 0
  %741 = vmatpush1.bf16.msra.mxu0 0
  %742 = vmatprep.subr.bf16.mxu0 0
  %743 = vmatpush1.bf16.msra.mxu0 0
  %744 = vmatprep.subr.bf16.mxu0 0
  %745 = vmatpush1.bf16.msra.mxu0 0
  %746 = vmatprep.subr.bf16.mxu0 0
  %747 = vmatpush1.bf16.msra.mxu0 0
  %748 = vmatprep.subr.bf16.mxu0 0
  %749 = vmatpush1.bf16.msra.mxu0 0
  %750 = vmatprep.subr.bf16.mxu0 0
  %751 = vmatpush1.bf16.msra.mxu0 0
  %752 = vmatprep.subr.bf16.mxu0 0
  %753 = vmatpush1.bf16.msra.mxu0 0
  %754 = vmatprep.subr.bf16.mxu0 0
  %755 = vmatpush1.bf16.msra.mxu0 0
  %756 = vmatprep.mubr.bf16.mxu0 0
  %757 = vmatmul.mubr.bf16.gmra.mrb[0].mxu0 %v719
  %v758 = vpop.f32.mrb[0].mxu0
  %v759 = vadd.f32 0.0, %v758
  %v760 = vpop.f32.mrb[0].mxu0
  %v761 = vpop.f32.mrb[0].mxu0
  %v762 = vadd.f32 0.0, %v761
  %v763 = vpop.f32.mrb[0].mxu0
  %764 = vdwg.mxu0
  %765 = vst.msk [vmem:[%s10] sm:$0xff] %vm44, %v759
  %766 = vst.msk [vmem:[%s10 + $0x8] sm:$0xff] %vm44, %v762
  // Predicated region
  $region42: #{tpu_custom_call.1} parent=0 // pred_check
    _
  $region43: #{tpu_custom_call.1} parent=0 // pred_check_branch
    %768 = sbr.rel (0) target = $region45
  $region44: #{tpu_custom_call.1} parent=0 // pred_region
    _
  $region45: #{tpu_custom_call.1} parent=0 // pred_fallthru
    _
  // Predicated region
  $region46: #{tpu_custom_call.1} parent=0 // pred_check
    _
  $region47: #{tpu_custom_call.1} parent=0 // pred_check_branch
    %770 = sbr.rel (0) target = $region49
  $region48: #{tpu_custom_call.1} parent=0 // pred_region
    _
  $region49: #{tpu_custom_call.1} parent=0 // pred_fallthru
    _

</llo_original>
